<compile_context>
chip_gen: v6e
topology: v6e:2x2x1
jax: 0.10.0
libtpu: 0.0.40
codegen_flags: <defaults>
</compile_context>

<pallas_src>
import jax
import jax.numpy as jnp
from jax.experimental import pallas as pl
from jax.experimental.pallas import tpu as pltpu

# Deterministic "calibrated" quantization params (quint8, per-tensor affine).
QSCALE = 0.05
INV_QSCALE = 1.0 / QSCALE
QZERO = 128.0


def _round_up(n, m):
    return ((n + m - 1) // m) * m


# ---------------------------------------------------------------------------
# Pallas kernel: conv3x3 (im2col matmul) + bias + ReLU -> conv1x1 + bias
# (the QuantStub fake-quant is pre-applied to the raw input in the wrapper)
# ---------------------------------------------------------------------------
def fused_head_kernel(cols_ref, w1_ref, b1_ref, w2_ref, b2_ref, o_ref):
    # conv3x3 via im2col matmul: bf16 MXU inputs, f32 accumulate, fused
    # bias + ReLU.  Hidden activations never leave the chip.
    h = jnp.dot(cols_ref[...], w1_ref[...], preferred_element_type=jnp.float32)
    h = jnp.maximum(h + b1_ref[...], 0.0)

    # conv1x1 on the on-chip hidden activations; store only the Cout lanes
    # actually needed (unpadded output -> no 16x writeback, no re-slice pass).
    y = jnp.dot(h.astype(jnp.bfloat16), w2_ref[...],
                preferred_element_type=jnp.float32)
    o_ref[...] = (y + b2_ref[...]).astype(o_ref.dtype)


# ---------------------------------------------------------------------------
# Wrappers (glue)
# ---------------------------------------------------------------------------
def _pick_m_tile(m):
    # Require >=4 grid steps so v7x's two TensorCores each get >=2 pipelined
    # steps (harmless on single-TC v5e/v6e); allow tiles up to 4096 rows for
    # large M to amortize per-grid-step overhead.  Worst case double-buffered
    # cols+out at tm=4096 is < 1 MiB, far under every generation's VMEM.
    for tm in (4096, 2048, 1024, 512, 256, 128, 64, 32, 16, 8):
        if m >= 4 * tm:
            return tm
    return 8


def fused_conv_head(cols, w1_mat, b1_2d, w2_mat, b2_2d):
    """cols: (M, K) bf16; w1_mat: (K, Cmid) bf16; w2_mat: (Cmid, Cout) bf16."""
    M, K = cols.shape
    cmid = w1_mat.shape[1]
    cout = w2_mat.shape[1]

    tm = _pick_m_tile(M)
    mp = _round_up(M, tm)
    if mp != M:
        cols = jnp.pad(cols, ((0, mp - M), (0, 0)))
    grid = (mp // tm,)

    out = pl.pallas_call(
        fused_head_kernel,
        out_shape=jax.ShapeDtypeStruct((mp, cout), jnp.float32),
        grid=grid,
        in_specs=[
            pl.BlockSpec((tm, K), lambda i: (i, 0)),      # A tile (pipelined)
            pl.BlockSpec((K, cmid), lambda i: (0, 0)),    # W1 resident
            pl.BlockSpec((1, cmid), lambda i: (0, 0)),    # b1 resident
            pl.BlockSpec((cmid, cout), lambda i: (0, 0)), # W2 resident
            pl.BlockSpec((1, cout), lambda i: (0, 0)),    # b2 resident
        ],
        out_specs=pl.BlockSpec((tm, cout), lambda i: (i, 0)),
        compiler_params=pltpu.CompilerParams(
            dimension_semantics=("parallel",)),
    )(cols, w1_mat, b1_2d, w2_mat, b2_2d)

    if mp != M:
        # Padded M rows hold relu(b1)@W2+b2 garbage; slice them off.
        out = out[:M]
    return out


def im2col_3x3_nhwc(x_nhwc):
    """x: (B, H, W, C) NHWC, pad=1, stride=1 -> (B*H*W, 9*C), tap-major cols.

    Kept in bf16 and WITHOUT lane padding of K so the expanded matrix costs
    9*C*2 bytes/pixel instead of the previous 128*4 bytes/pixel.
    TODO(synk): an in-kernel halo-band DMA im2col would remove this expanded
    HBM matrix entirely.
    """
    B, H, W, C = x_nhwc.shape
    xp = jnp.pad(x_nhwc, ((0, 0), (1, 1), (1, 1), (0, 0)))
    taps = [xp[:, dh:dh + H, dw:dw + W, :] for dh in range(3) for dw in range(3)]
    cols = jnp.concatenate(taps, axis=-1)                 # (B, H, W, 9*C)
    return cols.reshape(B * H * W, 9 * C)


def quantized_model_forward(x, params):
    """QuantizedModel.forward: quant -> model_fp32 -> dequant (NCHW in/out)."""
    B, C, H, W = x.shape
    w1, b1, w2, b2 = params["w1"], params["b1"], params["w2"], params["b2"]
    Cmid = w1.shape[0]
    Cout = w2.shape[0]
    K = 9 * C

    # QuantStub: per-tensor affine fake-quant on the quint8 grid, applied once
    # to the raw input (quant(0) == 0, so it commutes with the zero padding of
    # im2col), then stored as bf16 for the MXU.  jnp.round is half-to-even,
    # matching torch's quantize rounding.
    q = jnp.clip(jnp.round(x * INV_QSCALE) + QZERO, 0.0, 255.0)
    xq = ((q - QZERO) * QSCALE).astype(jnp.bfloat16)

    # Channels-last im2col of the (already fake-quantized) input.
    x_nhwc = jnp.transpose(xq, (0, 2, 3, 1))
    cols = im2col_3x3_nhwc(x_nhwc)                        # (M, 9C) bf16

    # Weight prep: tap-major (dh, dw, cin) rows match the im2col columns;
    # bf16 for the MXU (accumulation stays f32), biases stay f32.
    w1_mat = jnp.transpose(w1, (2, 3, 1, 0)).reshape(K, Cmid).astype(jnp.bfloat16)
    b1_2d = b1.reshape(1, Cmid).astype(jnp.float32)
    w2_mat = w2.T.astype(jnp.bfloat16)                    # (Cmid, Cout)
    b2_2d = b2.reshape(1, Cout).astype(jnp.float32)

    y = fused_conv_head(cols, w1_mat, b1_2d, w2_mat, b2_2d)   # (M, Cout) f32

    # Back to NCHW to match the PyTorch module's output layout (now a cheap
    # pass over the small, unpadded output).  DeQuantStub is identity on fp32.
    return y.reshape(B, H, W, Cout).transpose(0, 3, 1, 2)


def init_params(key, cin, cmid, cout):
    k1, k2, k3, k4 = jax.random.split(key, 4)
    return {
        "w1": 0.1 * jax.random.normal(k1, (cmid, cin, 3, 3), jnp.float32),
        "b1": 0.1 * jax.random.normal(k2, (cmid,), jnp.float32),
        "w2": 0.1 * jax.random.normal(k3, (cout, cmid), jnp.float32),
        "b2": 0.1 * jax.random.normal(k4, (cout,), jnp.float32),
    }


if __name__ == "__main__":
    key = jax.random.PRNGKey(0)
    kx, kp = jax.random.split(key)

    B, C, H, W = 2, 4, 16, 16
    Cmid, Cout = 32, 8

    x = jax.random.normal(kx, (B, C, H, W), jnp.float32)
    params = init_params(kp, C, Cmid, Cout)

    out = jax.jit(quantized_model_forward)(x, params)
    out = jax.block_until_ready(out)
    assert out.shape == (B, Cout, H, W)
    print("KERNEL_OK")
</pallas_src>

<mosaic_0001>
module attributes {stable_mosaic.version = 11 : i64} {
  func.func @fused_head_kernel(%arg0: i32, %arg1: memref<128x36xbf16, #tpu.memory_space<vmem>>, %arg2: memref<36x32xbf16, #tpu.memory_space<vmem>>, %arg3: memref<1x32xf32, #tpu.memory_space<vmem>>, %arg4: memref<32x8xbf16, #tpu.memory_space<vmem>>, %arg5: memref<1x8xf32, #tpu.memory_space<vmem>>, %arg6: memref<128x8xf32, #tpu.memory_space<vmem>>) attributes {dimension_semantics = [#tpu.dimension_semantics<parallel>], iteration_bounds = array<i64: 4>, scalar_prefetch = 0 : i64, scratch_operands = 0 : i64, tpu.core_type = #tpu.core_type<tc>, window_params = [{transform_indices = @transform_0, window_bounds = array<i64: 128, 36>}, {pipeline_mode = #tpu.pipeline_mode<synchronous>, transform_indices = @transform_1, window_bounds = array<i64: 36, 32>}, {pipeline_mode = #tpu.pipeline_mode<synchronous>, transform_indices = @transform_2, window_bounds = array<i64: 1, 32>}, {pipeline_mode = #tpu.pipeline_mode<synchronous>, transform_indices = @transform_3, window_bounds = array<i64: 32, 8>}, {pipeline_mode = #tpu.pipeline_mode<synchronous>, transform_indices = @transform_4, window_bounds = array<i64: 1, 8>}, {transform_indices = @transform_5, window_bounds = array<i64: 128, 8>}]} {
    %c0 = arith.constant 0 : index
    %c0_0 = arith.constant 0 : index
    %0 = vector.load %arg1[%c0, %c0_0] : memref<128x36xbf16, #tpu.memory_space<vmem>>, vector<128x36xbf16>
    %c0_1 = arith.constant 0 : index
    %c0_2 = arith.constant 0 : index
    %1 = vector.load %arg2[%c0_1, %c0_2] : memref<36x32xbf16, #tpu.memory_space<vmem>>, vector<36x32xbf16>
    %cst = arith.constant dense<0.000000e+00> : vector<128x32xf32>
    %2 = tpu.matmul %0, %1, %cst {dimension_numbers = #tpu.dot_dimension_numbers<[1], [0], [0], [1], [0, 0, 1, 1], [], []>} : vector<128x36xbf16>, vector<36x32xbf16>, vector<128x32xf32> -> vector<128x32xf32>
    %c0_3 = arith.constant 0 : index
    %c0_4 = arith.constant 0 : index
    %3 = vector.load %arg3[%c0_3, %c0_4] : memref<1x32xf32, #tpu.memory_space<vmem>>, vector<1x32xf32>
    %4 = vector.broadcast %3 : vector<1x32xf32> to vector<128x32xf32>
    %5 = arith.addf %2, %4 : vector<128x32xf32>
    %cst_5 = arith.constant 0.000000e+00 : f32
    %6 = vector.broadcast %cst_5 : f32 to vector<128x32xf32>
    %7 = arith.maximumf %5, %6 : vector<128x32xf32>
    %8 = arith.truncf %7 : vector<128x32xf32> to vector<128x32xbf16>
    %c0_6 = arith.constant 0 : index
    %c0_7 = arith.constant 0 : index
    %9 = vector.load %arg4[%c0_6, %c0_7] : memref<32x8xbf16, #tpu.memory_space<vmem>>, vector<32x8xbf16>
    %cst_8 = arith.constant dense<0.000000e+00> : vector<128x8xf32>
    %10 = tpu.matmul %8, %9, %cst_8 {dimension_numbers = #tpu.dot_dimension_numbers<[1], [0], [0], [1], [0, 0, 1, 1], [], []>} : vector<128x32xbf16>, vector<32x8xbf16>, vector<128x8xf32> -> vector<128x8xf32>
    %c0_9 = arith.constant 0 : index
    %c0_10 = arith.constant 0 : index
    %11 = vector.load %arg5[%c0_9, %c0_10] : memref<1x8xf32, #tpu.memory_space<vmem>>, vector<1x8xf32>
    %12 = vector.broadcast %11 : vector<1x8xf32> to vector<128x8xf32>
    %13 = arith.addf %10, %12 : vector<128x8xf32>
    %c0_11 = arith.constant 0 : index
    %c0_12 = arith.constant 0 : index
    %14 = vector.load %arg6[%c0_11, %c0_12] : memref<128x8xf32, #tpu.memory_space<vmem>>, vector<128x8xf32>
    tpu.vector_store %arg6[%c0_11, %c0_12], %13 {strides = array<i32>} : memref<128x8xf32, #tpu.memory_space<vmem>>, vector<128x8xf32>,
    return
  }
  func.func @transform_0(%arg0: i32) -> (i32, i32) {
    %c0_i32 = arith.constant 0 : i32
    %c0_i32_0 = arith.constant 0 : i32
    return %arg0, %c0_i32 : i32, i32
  }
  func.func @transform_1(%arg0: i32) -> (i32, i32) {
    %c0_i32 = arith.constant 0 : i32
    %c0_i32_0 = arith.constant 0 : i32
    %c0_i32_1 = arith.constant 0 : i32
    return %c0_i32, %c0_i32_0 : i32, i32
  }
  func.func @transform_2(%arg0: i32) -> (i32, i32) {
    %c0_i32 = arith.constant 0 : i32
    %c0_i32_0 = arith.constant 0 : i32
    %c0_i32_1 = arith.constant 0 : i32
    return %c0_i32, %c0_i32_0 : i32, i32
  }
  func.func @transform_3(%arg0: i32) -> (i32, i32) {
    %c0_i32 = arith.constant 0 : i32
    %c0_i32_0 = arith.constant 0 : i32
    %c0_i32_1 = arith.constant 0 : i32
    return %c0_i32, %c0_i32_0 : i32, i32
  }
  func.func @transform_4(%arg0: i32) -> (i32, i32) {
    %c0_i32 = arith.constant 0 : i32
    %c0_i32_0 = arith.constant 0 : i32
    %c0_i32_1 = arith.constant 0 : i32
    return %c0_i32, %c0_i32_0 : i32, i32
  }
  func.func @transform_5(%arg0: i32) -> (i32, i32) {
    %c0_i32 = arith.constant 0 : i32
    %c0_i32_0 = arith.constant 0 : i32
    return %arg0, %c0_i32 : i32, i32
  }
}

</mosaic_0001>

<llo_original>
// kernel: quantized_model_forward.1
$region0: #{quantized_model_forward.1}
  #allocation0 [shape = 'u32[]', space=smem, size = 0x4, offset = 0x4, fixed_abs, tag = 'smem constant byte address 0x4 - core index']
  #allocation1 [shape = 'u32[144,128]{1,0:T(1,128)}', space=vmem, size = 0x12000, scoped, tag = 'internal scratch']
  %s0 = inlined_call_operand.vmem [shape: bf16[512,36], index: 0, kind: input, shape index: {}]
  %s1 = inlined_call_operand.vmem [shape: bf16[36,32], index: 1, kind: input, shape index: {}]
  %s2 = inlined_call_operand.vmem [shape: f32[1,32], index: 2, kind: input, shape index: {}]
  %s3 = inlined_call_operand.vmem [shape: bf16[32,8], index: 3, kind: input, shape index: {}]
  %s4 = inlined_call_operand.vmem [shape: f32[1,8], index: 4, kind: input, shape index: {}]
  %s5 = inlined_call_operand.vmem [shape: f32[512,8], index: 5, kind: output, shape index: {}]
  %s6 = sld [smem:[#allocation0]]
  $region53: #{quantized_model_forward.1} parent=0
    _
  %s8 = ssub.s32 1, %s6
  %s9 = scalar_select 0, %s8, %s6
  loop: start=0, step=1, limit=6
  $region2: #{quantized_model_forward.1} parent=0 // loop_pre_header
    _
  $region3: #{quantized_model_forward.1} parent=0 // loop_header
    %s11 = sphi 0, %s15
    %p12 = scmp.ge.s32.totalorder %s11, 6
    %s21 = sphi 0, %s23
    %s24 = sphi 0, %s21
    %s25 = sphi 0, %s24
    %s41 = sphi 0, %s25
    %s45 = sphi 0, %s45
    %s47 = sphi 0, %s45
    %s48 = sphi 0, %s47
    %s62 = sphi 0, %s48
    %s66 = sphi 0, %s66
    %s68 = sphi 0, %s66
    %s69 = sphi 0, %s68
    %s83 = sphi 0, %s69
    %s87 = sphi 0, %s87
    %s89 = sphi 0, %s87
    %s90 = sphi 0, %s89
    %s104 = sphi 0, %s90
    %s108 = sphi 0, %s108
    %s110 = sphi 0, %s108
    %s111 = sphi 0, %s110
    %s125 = sphi 0, %s111
    %s131 = sphi 0, %s133
    %s134 = sphi 0, %s131
    %s135 = sphi 0, %s134
    %s151 = sphi 0, %s135
  $region4: #{quantized_model_forward.1} parent=0 // loop_header_branch
    %14 = sbr.rel (%p12) target = $region8
  $region5: #{quantized_model_forward.1} parent=0 // loop_body
    %s16 = ssub.s32 %s11, 1
    %s17 = ssub.s32 %s11, 2
    %s18 = sadd.s32 %s11, 1
    %s19 = ssub.s32 %s11, %s18
    %p20 = scmp.eq.s32.totalorder %s19, 0
    %s22 = sadd.s32 %s21, 1
    %s23 = scalar_select %p20, %s21, %s22
    %p26 = pneg %p20
    %p27 = scmp.eq.s32.totalorder %s11, 3
    %p28 = por %p26, %p27
    %p29 = scmp.ne.s32.totalorder %s21, %s24
    %p30 = scmp.eq.s32.totalorder %s11, 0
    %p31 = por %p29, %p30
    %p32 = scmp.ne.s32.totalorder %s21, %s24
    %p33 = scmp.eq.s32.totalorder %s16, 3
    %p34 = por %p32, %p33
    %p35 = scmp.ne.s32.totalorder %s24, %s25
    %p36 = scmp.eq.s32.totalorder %s16, 0
    %p37 = por %p35, %p36
    %p38 = scmp.ne.s32.totalorder %s24, %s25
    %p39 = scmp.eq.s32.totalorder %s17, 3
    %p40 = por %p38, %p39
    %p42 = scmp.ne.s32.totalorder %s25, %s41
    %p43 = scmp.eq.s32.totalorder %s17, 0
    %p44 = por %p42, %p43
    %s46 = sadd.s32 %s45, 1
    %p49 = scmp.eq.s32.totalorder %s11, 3
    %p50 = scmp.ne.s32.totalorder %s45, %s47
    %p51 = scmp.eq.s32.totalorder %s11, 0
    %p52 = por %p50, %p51
    %p53 = scmp.ne.s32.totalorder %s45, %s47
    %p54 = scmp.eq.s32.totalorder %s16, 3
    %p55 = por %p53, %p54
    %p56 = scmp.ne.s32.totalorder %s47, %s48
    %p57 = scmp.eq.s32.totalorder %s16, 0
    %p58 = por %p56, %p57
    %p59 = scmp.ne.s32.totalorder %s47, %s48
    %p60 = scmp.eq.s32.totalorder %s17, 3
    %p61 = por %p59, %p60
    %p63 = scmp.ne.s32.totalorder %s48, %s62
    %p64 = scmp.eq.s32.totalorder %s17, 0
    %p65 = por %p63, %p64
    %s67 = sadd.s32 %s66, 1
    %p70 = scmp.eq.s32.totalorder %s11, 3
    %p71 = scmp.ne.s32.totalorder %s66, %s68
    %p72 = scmp.eq.s32.totalorder %s11, 0
    %p73 = por %p71, %p72
    %p74 = scmp.ne.s32.totalorder %s66, %s68
    %p75 = scmp.eq.s32.totalorder %s16, 3
    %p76 = por %p74, %p75
    %p77 = scmp.ne.s32.totalorder %s68, %s69
    %p78 = scmp.eq.s32.totalorder %s16, 0
    %p79 = por %p77, %p78
    %p80 = scmp.ne.s32.totalorder %s68, %s69
    %p81 = scmp.eq.s32.totalorder %s17, 3
    %p82 = por %p80, %p81
    %p84 = scmp.ne.s32.totalorder %s69, %s83
    %p85 = scmp.eq.s32.totalorder %s17, 0
    %p86 = por %p84, %p85
    %s88 = sadd.s32 %s87, 1
    %p91 = scmp.eq.s32.totalorder %s11, 3
    %p92 = scmp.ne.s32.totalorder %s87, %s89
    %p93 = scmp.eq.s32.totalorder %s11, 0
    %p94 = por %p92, %p93
    %p95 = scmp.ne.s32.totalorder %s87, %s89
    %p96 = scmp.eq.s32.totalorder %s16, 3
    %p97 = por %p95, %p96
    %p98 = scmp.ne.s32.totalorder %s89, %s90
    %p99 = scmp.eq.s32.totalorder %s16, 0
    %p100 = por %p98, %p99
    %p101 = scmp.ne.s32.totalorder %s89, %s90
    %p102 = scmp.eq.s32.totalorder %s17, 3
    %p103 = por %p101, %p102
    %p105 = scmp.ne.s32.totalorder %s90, %s104
    %p106 = scmp.eq.s32.totalorder %s17, 0
    %p107 = por %p105, %p106
    %s109 = sadd.s32 %s108, 1
    %p112 = scmp.eq.s32.totalorder %s11, 3
    %p113 = scmp.ne.s32.totalorder %s108, %s110
    %p114 = scmp.eq.s32.totalorder %s11, 0
    %p115 = por %p113, %p114
    %p116 = scmp.ne.s32.totalorder %s108, %s110
    %p117 = scmp.eq.s32.totalorder %s16, 3
    %p118 = por %p116, %p117
    %p119 = scmp.ne.s32.totalorder %s110, %s111
    %p120 = scmp.eq.s32.totalorder %s16, 0
    %p121 = por %p119, %p120
    %p122 = scmp.ne.s32.totalorder %s110, %s111
    %p123 = scmp.eq.s32.totalorder %s17, 3
    %p124 = por %p122, %p123
    %p126 = scmp.ne.s32.totalorder %s111, %s125
    %p127 = scmp.eq.s32.totalorder %s17, 0
    %p128 = por %p126, %p127
    %s129 = ssub.s32 %s11, %s18
    %p130 = scmp.eq.s32.totalorder %s129, 0
    %s132 = sadd.s32 %s131, 1
    %s133 = scalar_select %p130, %s131, %s132
    %p136 = pneg %p130
    %p137 = scmp.eq.s32.totalorder %s11, 3
    %p138 = por %p136, %p137
    %p139 = scmp.ne.s32.totalorder %s131, %s134
    %p140 = scmp.eq.s32.totalorder %s11, 0
    %p141 = por %p139, %p140
    %p142 = scmp.ne.s32.totalorder %s131, %s134
    %p143 = scmp.eq.s32.totalorder %s16, 3
    %p144 = por %p142, %p143
    %p145 = scmp.ne.s32.totalorder %s134, %s135
    %p146 = scmp.eq.s32.totalorder %s16, 0
    %p147 = por %p145, %p146
    %p148 = scmp.ne.s32.totalorder %s134, %s135
    %p149 = scmp.eq.s32.totalorder %s17, 3
    %p150 = por %p148, %p149
    %p152 = scmp.ne.s32.totalorder %s135, %s151
    %p153 = scmp.eq.s32.totalorder %s17, 0
    %p154 = por %p152, %p153
    %p155 = scmp.le.s32.totalorder 1, %s11
    %p156 = scmp.lt.s32.totalorder %s11, 5
    %p157 = pnand %p155, %p156
    %p158 = pneg %p157
    // Predicated region
    $region9: #{quantized_model_forward.1} parent=5 // pred_check
      _
    $region10: #{quantized_model_forward.1} parent=5 // pred_check_branch
      %160 = sbr.rel (%p157) target = $region12
    $region11: #{quantized_model_forward.1} parent=5 // pred_region
      %s161 = ssub.s32 %s11, 1
      // Predicated region
      $region13: #{quantized_model_forward.1} parent=11 // pred_check
        %p162 = pneg %p58
      $region14: #{quantized_model_forward.1} parent=11 // pred_check_branch
        %164 = sbr.rel (%p162) target = $region16
      $region15: #{quantized_model_forward.1} parent=11 // pred_region
        _
      $region16: #{quantized_model_forward.1} parent=11 // pred_fallthru
        _
      // Predicated region
      $region17: #{quantized_model_forward.1} parent=11 // pred_check
        %p165 = pneg %p79
      $region18: #{quantized_model_forward.1} parent=11 // pred_check_branch
        %167 = sbr.rel (%p165) target = $region20
      $region19: #{quantized_model_forward.1} parent=11 // pred_region
        _
      $region20: #{quantized_model_forward.1} parent=11 // pred_fallthru
        _
      // Predicated region
      $region21: #{quantized_model_forward.1} parent=11 // pred_check
        %p168 = pneg %p100
      $region22: #{quantized_model_forward.1} parent=11 // pred_check_branch
        %170 = sbr.rel (%p168) target = $region24
      $region23: #{quantized_model_forward.1} parent=11 // pred_region
        _
      $region24: #{quantized_model_forward.1} parent=11 // pred_fallthru
        _
      // Predicated region
      $region25: #{quantized_model_forward.1} parent=11 // pred_check
        %p171 = pneg %p121
      $region26: #{quantized_model_forward.1} parent=11 // pred_check_branch
        %173 = sbr.rel (%p171) target = $region28
      $region27: #{quantized_model_forward.1} parent=11 // pred_region
        _
      $region28: #{quantized_model_forward.1} parent=11 // pred_fallthru
        _
    $region12: #{quantized_model_forward.1} parent=5 // pred_fallthru
      _
    %p174 = scmp.lt.s32.totalorder %s11, 4
    // Predicated region
    $region29: #{quantized_model_forward.1} parent=5 // pred_check
      %p175 = pneg %p174
    $region30: #{quantized_model_forward.1} parent=5 // pred_check_branch
      %177 = sbr.rel (%p175) target = $region32
    $region31: #{quantized_model_forward.1} parent=5 // pred_region
      // Predicated region
      $region33: #{quantized_model_forward.1} parent=31 // pred_check
        %p178 = pneg %p31
      $region34: #{quantized_model_forward.1} parent=31 // pred_check_branch
        %180 = sbr.rel (%p178) target = $region36
      $region35: #{quantized_model_forward.1} parent=31 // pred_region
        %s181 = smul.u32 16, %s11
        %p182 = scmp.lt.s32.totalorder %s181, 63
        %s183 = scalar_select %p182, %s181, 63
        %s184 = smul.addr %s183, 4
        %s185 = scalar_lea.vmem %s0, %s184
        %s186 = smul.u32 16, %s11
      $region36: #{quantized_model_forward.1} parent=31 // pred_fallthru
        _
    $region32: #{quantized_model_forward.1} parent=5 // pred_fallthru
      _
    %p187 = scmp.le.s32.totalorder 1, %s11
    %p188 = scmp.lt.s32.totalorder %s11, 5
    %p189 = pnand %p187, %p188
    %p190 = pneg %p189
    // Predicated region
    $region37: #{quantized_model_forward.1} parent=5 // pred_check
      _
    $region38: #{quantized_model_forward.1} parent=5 // pred_check_branch
      %192 = sbr.rel (%p189) target = $region40
    $region39: #{quantized_model_forward.1} parent=5 // pred_region
      %s193 = ssub.s32 %s11, 1
      %s194 = smul.u32 16, %s16
      %p195 = scmp.lt.s32.totalorder %s194, 63
      %s196 = scalar_select %p195, %s194, 63
      %s197 = smul.addr %s196, 4
      %s198 = scalar_lea.vmem %s0, %s197
      %p199 = pneg %p37
      %p200 = pneg %p34
      %p201 = pneg %p58
      %p202 = pneg %p55
      %p203 = pneg %p79
      %p204 = pneg %p76
      %p205 = pneg %p100
      %p206 = pneg %p97
      %p207 = pneg %p121
      %p208 = pneg %p118
      %p209 = pneg %p147
      %p210 = pneg %p144
      %s211 = smul.u32 16, %s16
      %p212 = scmp.lt.s32.totalorder %s211, 63
      %s213 = scalar_select %p212, %s211, 63
      %s214 = smul.addr %s213, 8
      %s215 = scalar_lea.vmem %s5, %s214
      %s216 = smul.u32 16, %s16
      %p217 = scmp.lt.s32.totalorder %s216, 63
      %s218 = scalar_select %p217, %s216, 63
      %s219 = smul.addr %s218, 4
      %s220 = scalar_lea.vmem %s0, %s219
      %s221 = smul.u32 16, %s16
      %s222 = smul.u32 16, %s16
      %p223 = scmp.lt.s32.totalorder %s222, 63
      %s224 = scalar_select %p223, %s222, 63
      %s225 = smul.addr %s224, 8
      %s226 = scalar_lea.vmem %s5, %s225
      %s227 = smul.u32 16, %s16
      %v229 = vld [vmem:[%s220] sm:$0xf]
      %v230 = vld [vmem:[%s220 + $0x4] sm:$0xf]
      %v231 = vld [vmem:[%s220 + $0x8] sm:$0xf]
      %v232 = vld [vmem:[%s220 + $0xc] sm:$0xf]
      %v233 = vld [vmem:[%s220 + $0x10] sm:$0xf]
      %v234 = vld [vmem:[%s220 + $0x14] sm:$0xf]
      %v235 = vld [vmem:[%s220 + $0x18] sm:$0xf]
      %v236 = vld [vmem:[%s220 + $0x1c] sm:$0xf]
      %v237 = vld [vmem:[%s220 + $0x20] sm:$0xf]
      %v238 = vld [vmem:[%s220 + $0x24] sm:$0xf]
      %v239 = vld [vmem:[%s220 + $0x28] sm:$0xf]
      %v240 = vld [vmem:[%s220 + $0x2c] sm:$0xf]
      %v241 = vld [vmem:[%s220 + $0x30] sm:$0xf]
      %v242 = vld [vmem:[%s220 + $0x34] sm:$0xf]
      %v243 = vld [vmem:[%s220 + $0x38] sm:$0xf]
      %v244 = vld [vmem:[%s220 + $0x3c] sm:$0xf]
      %v245 = vld [vmem:[%s1] sm:$0xf]
      %v246 = vld [vmem:[%s1 + $0x4] sm:$0xf]
      %v247 = vld [vmem:[%s1 + $0x8] sm:$0xf]
      %v248 = vld [vmem:[%s1 + $0xc] sm:$0xf]
      %v249 = vld [vmem:[%s1 + $0x10] sm:$0x3]
      %v250 = vld [vmem:[%s2] sm:$0x1]
      %v252 = vlaneseq
      %v253 = vshrl.u32 %v252, 7
      %v254 = vsub.s32 0, %v253
      %v255 = vrot.slane %v250, %v254
      %v273 = vunpack.c.l.b16 %v229
      %v274 = vunpack.c.l.b16 %v230
      %v275 = vunpack.c.l.b16 %v231
      %v276 = vunpack.c.l.b16 %v232
      %v277 = vunpack.c.l.b16 %v233
      %v278 = vunpack.c.l.b16 %v234
      %v279 = vunpack.c.l.b16 %v235
      %v280 = vunpack.c.l.b16 %v236
      %v281 = vunpack.c.l.b16 %v237
      %v282 = vunpack.c.l.b16 %v238
      %v283 = vunpack.c.l.b16 %v239
      %v284 = vunpack.c.l.b16 %v240
      %v285 = vunpack.c.l.b16 %v241
      %v286 = vunpack.c.l.b16 %v242
      %v287 = vunpack.c.l.b16 %v243
      %v288 = vunpack.c.l.b16 %v244
      %v289 = vpack.c.b16 %v274, %v273
      %v290 = vpack.c.b16 %v276, %v275
      %v291 = vpack.c.b16 %v278, %v277
      %v292 = vpack.c.b16 %v280, %v279
      %v293 = vpack.c.b16 %v282, %v281
      %v294 = vpack.c.b16 %v284, %v283
      %v295 = vpack.c.b16 %v286, %v285
      %v296 = vpack.c.b16 %v288, %v287
      %v302 = vunpack.c.l.b16 %v245
      %v303 = vunpack.c.l.b16 %v246
      %v304 = vunpack.c.l.b16 %v247
      %v305 = vunpack.c.l.b16 %v248
      %v306 = vunpack.c.l.b16 %v249
      %v307 = vpack.c.b16 %v303, %v302
      %v308 = vpack.c.b16 %v305, %v304
      %v309 = vpack.c.b16 %v306, %v306
      %vm312 = vcmask 293888
      %v314 = vsel %vm312, %v289, 0
      %v317 = vsel %vm312, %v290, 0
      %v320 = vsel %vm312, %v291, 0
      %v323 = vsel %vm312, %v292, 0
      %v326 = vsel %vm312, %v293, 0
      %v329 = vsel %vm312, %v294, 0
      %v332 = vsel %vm312, %v295, 0
      %v335 = vsel %vm312, %v296, 0
      %vm337 = vcmask 1041408
      %v339 = vsel %vm337, %v309, 0
      %341 = vmatprep.subr.bf16.mxu0 0
      %342 = vmatpush1.bf16.msra.mxu0 0
      %343 = vmatprep.subr.bf16.mxu0 0
      %344 = vmatpush1.bf16.msra.mxu0 0
      %345 = vmatprep.subr.bf16.mxu0 0
      %346 = vmatpush1.bf16.msra.mxu0 0
      %347 = vmatprep.subr.bf16.mxu0 0
      %348 = vmatpush1.bf16.msra.mxu0 0
      %349 = vmatprep.subr.bf16.mxu0 0
      %350 = vmatpush1.bf16.msra.mxu0 0
      %351 = vmatprep.subr.bf16.mxu0 0
      %352 = vmatpush1.bf16.msra.mxu0 %v339
      %353 = vmatprep.subr.bf16.mxu0 0
      %354 = vmatpush1.bf16.msra.mxu0 %v308
      %355 = vmatprep.subr.bf16.mxu0 0
      %356 = vmatpush1.bf16.msra.mxu0 %v307
      %357 = vmatprep.subr.bf16.mxu0 0
      %358 = vmatpush2.bf16.msra.mxu0 0
      %359 = vmatprep.subr.bf16.mxu0 0
      %360 = vmatpush2.bf16.msra.mxu0 0
      %361 = vmatprep.subr.bf16.mxu0 0
      %362 = vmatpush2.bf16.msra.mxu0 0
      %363 = vmatprep.subr.bf16.mxu0 0
      %364 = vmatpush2.bf16.msra.mxu0 0
      %365 = vmatprep.subr.bf16.mxu0 0
      %366 = vmatpush2.bf16.msra.mxu0 0
      %367 = vmatprep.subr.bf16.mxu0 0
      %368 = vmatpush2.bf16.msra.mxu0 0
      %369 = vmatprep.subr.bf16.mxu0 0
      %370 = vmatpush2.bf16.msra.mxu0 0
      %371 = vmatprep.subr.bf16.mxu0 0
      %372 = vmatpush2.bf16.msra.mxu0 0
      %373 = vmatprep.mubr.bf16.mxu0 0
      %374 = vmatmul.mubr.bf16.gmra.mxu0 %v314
      %v375 = vpop.f32.mrf.mxu0
      %v376 = vadd.f32 %v255, %v375
      %v377 = vpop.f32.mrf.mxu0
      %v378 = vpop.f32.mrf.mxu0
      %v379 = vadd.f32 %v255, %v378
      %v380 = vpop.f32.mrf.mxu0
      %381 = vmatprep.mubr.bf16.mxu0 0
      %382 = vmatmul.mubr.bf16.gmra.mxu0 %v317
      %v383 = vpop.f32.mrf.mxu0
      %v384 = vadd.f32 %v255, %v383
      %v385 = vpop.f32.mrf.mxu0
      %v386 = vpop.f32.mrf.mxu0
      %v387 = vadd.f32 %v255, %v386
      %v388 = vpop.f32.mrf.mxu0
      %389 = vmatprep.mubr.bf16.mxu0 0
      %390 = vmatmul.mubr.bf16.gmra.mxu0 %v320
      %v391 = vpop.f32.mrf.mxu0
      %v392 = vadd.f32 %v255, %v391
      %v393 = vpop.f32.mrf.mxu0
      %v394 = vpop.f32.mrf.mxu0
      %v395 = vadd.f32 %v255, %v394
      %v396 = vpop.f32.mrf.mxu0
      %397 = vmatprep.mubr.bf16.mxu0 0
      %398 = vmatmul.mubr.bf16.gmra.mxu0 %v323
      %v399 = vpop.f32.mrf.mxu0
      %v400 = vadd.f32 %v255, %v399
      %v401 = vpop.f32.mrf.mxu0
      %v402 = vpop.f32.mrf.mxu0
      %v403 = vadd.f32 %v255, %v402
      %v404 = vpop.f32.mrf.mxu0
      %405 = vmatprep.mubr.bf16.mxu0 0
      %406 = vmatmul.mubr.bf16.gmra.mxu0 %v326
      %v407 = vpop.f32.mrf.mxu0
      %v408 = vadd.f32 %v255, %v407
      %v409 = vpop.f32.mrf.mxu0
      %v410 = vpop.f32.mrf.mxu0
      %v411 = vadd.f32 %v255, %v410
      %v412 = vpop.f32.mrf.mxu0
      %413 = vmatprep.mubr.bf16.mxu0 0
      %414 = vmatmul.mubr.bf16.gmra.mxu0 %v329
      %v415 = vpop.f32.mrf.mxu0
      %v416 = vadd.f32 %v255, %v415
      %v417 = vpop.f32.mrf.mxu0
      %v418 = vpop.f32.mrf.mxu0
      %v419 = vadd.f32 %v255, %v418
      %v420 = vpop.f32.mrf.mxu0
      %421 = vmatprep.mubr.bf16.mxu0 0
      %422 = vmatmul.mubr.bf16.gmra.mxu0 %v332
      %v423 = vpop.f32.mrf.mxu0
      %v424 = vadd.f32 %v255, %v423
      %v425 = vpop.f32.mrf.mxu0
      %v426 = vpop.f32.mrf.mxu0
      %v427 = vadd.f32 %v255, %v426
      %v428 = vpop.f32.mrf.mxu0
      %429 = vmatprep.mubr.bf16.mxu0 0
      %430 = vmatmul.mubr.bf16.gmra.mxu0 %v335
      %v431 = vpop.f32.mrf.mxu0
      %v432 = vadd.f32 %v255, %v431
      %v433 = vpop.f32.mrf.mxu0
      %v434 = vpop.f32.mrf.mxu0
      %v435 = vadd.f32 %v255, %v434
      %v436 = vpop.f32.mrf.mxu0
      %437 = vdwg.mxu0
      %v438 = vmax.f32 %v376, 0.0
      %v439 = vmax.f32 %v379, 0.0
      %v440 = vmax.f32 %v384, 0.0
      %v441 = vmax.f32 %v387, 0.0
      %v442 = vmax.f32 %v392, 0.0
      %v443 = vmax.f32 %v395, 0.0
      %v444 = vmax.f32 %v400, 0.0
      %v445 = vmax.f32 %v403, 0.0
      %v446 = vmax.f32 %v408, 0.0
      %v447 = vmax.f32 %v411, 0.0
      %v448 = vmax.f32 %v416, 0.0
      %v449 = vmax.f32 %v419, 0.0
      %v450 = vmax.f32 %v424, 0.0
      %v451 = vmax.f32 %v427, 0.0
      %v452 = vmax.f32 %v432, 0.0
      %v453 = vmax.f32 %v435, 0.0
      %v454 = vpack.c.bf16 %v439, %v438
      %v455 = vpack.c.bf16 %v441, %v440
      %v456 = vpack.c.bf16 %v443, %v442
      %v457 = vpack.c.bf16 %v445, %v444
      %v458 = vpack.c.bf16 %v447, %v446
      %v459 = vpack.c.bf16 %v449, %v448
      %v460 = vpack.c.bf16 %v451, %v450
      %v461 = vpack.c.bf16 %v453, %v452
      %v462 = vld [vmem:[%s3] sm:$0xf]
      %v463 = vld [vmem:[%s3 + $0x4] sm:$0xf]
      %v464 = vld [vmem:[%s3 + $0x8] sm:$0xf]
      %v465 = vld [vmem:[%s3 + $0xc] sm:$0xf]
      %v466 = vld [vmem:[%s4] sm:$0x1]
      %v468 = vlaneseq
      %v469 = vshrl.u32 %v468, 7
      %v470 = vsub.s32 0, %v469
      %v471 = vrot.slane %v466, %v470
      %v477 = vunpack.c.l.b16 %v462
      %v478 = vunpack.c.l.b16 %v463
      %v479 = vunpack.c.l.b16 %v464
      %v480 = vunpack.c.l.b16 %v465
      %v481 = vpack.c.b16 %v478, %v477
      %v482 = vpack.c.b16 %v480, %v479
      %vm485 = vcmask 261120
      %v487 = vsel %vm485, %v454, 0
      %v490 = vsel %vm485, %v455, 0
      %v493 = vsel %vm485, %v456, 0
      %v496 = vsel %vm485, %v457, 0
      %v499 = vsel %vm485, %v458, 0
      %v502 = vsel %vm485, %v459, 0
      %v505 = vsel %vm485, %v460, 0
      %v508 = vsel %vm485, %v461, 0
      %510 = vmatprep.subr.bf16.mxu0 0
      %511 = vmatpush1.bf16.msra.mxu0 0
      %512 = vmatprep.subr.bf16.mxu0 0
      %513 = vmatpush1.bf16.msra.mxu0 0
      %514 = vmatprep.subr.bf16.mxu0 0
      %515 = vmatpush1.bf16.msra.mxu0 0
      %516 = vmatprep.subr.bf16.mxu0 0
      %517 = vmatpush1.bf16.msra.mxu0 0
      %518 = vmatprep.subr.bf16.mxu0 0
      %519 = vmatpush1.bf16.msra.mxu0 0
      %520 = vmatprep.subr.bf16.mxu0 0
      %521 = vmatpush1.bf16.msra.mxu0 0
      %522 = vmatprep.subr.bf16.mxu0 0
      %523 = vmatpush1.bf16.msra.mxu0 %v482
      %524 = vmatprep.subr.bf16.mxu0 0
      %525 = vmatpush1.bf16.msra.mxu0 %v481
      %526 = vmatprep.subr.bf16.mxu0 0
      %527 = vmatpush2.bf16.msra.mxu0 0
      %528 = vmatprep.subr.bf16.mxu0 0
      %529 = vmatpush2.bf16.msra.mxu0 0
      %530 = vmatprep.subr.bf16.mxu0 0
      %531 = vmatpush2.bf16.msra.mxu0 0
      %532 = vmatprep.subr.bf16.mxu0 0
      %533 = vmatpush2.bf16.msra.mxu0 0
      %534 = vmatprep.subr.bf16.mxu0 0
      %535 = vmatpush2.bf16.msra.mxu0 0
      %536 = vmatprep.subr.bf16.mxu0 0
      %537 = vmatpush2.bf16.msra.mxu0 0
      %538 = vmatprep.subr.bf16.mxu0 0
      %539 = vmatpush2.bf16.msra.mxu0 0
      %540 = vmatprep.subr.bf16.mxu0 0
      %541 = vmatpush2.bf16.msra.mxu0 0
      %542 = vmatprep.mubr.bf16.mxu0 0
      %543 = vmatmul.mubr.bf16.gmra.mxu0 %v487
      %v544 = vpop.f32.mrf.mxu0
      %v545 = vadd.f32 %v471, %v544
      %v546 = vpop.f32.mrf.mxu0
      %v547 = vpop.f32.mrf.mxu0
      %v548 = vadd.f32 %v471, %v547
      %v549 = vpop.f32.mrf.mxu0
      %550 = vmatprep.mubr.bf16.mxu0 0
      %551 = vmatmul.mubr.bf16.gmra.mxu0 %v490
      %v552 = vpop.f32.mrf.mxu0
      %v553 = vadd.f32 %v471, %v552
      %v554 = vpop.f32.mrf.mxu0
      %v555 = vpop.f32.mrf.mxu0
      %v556 = vadd.f32 %v471, %v555
      %v557 = vpop.f32.mrf.mxu0
      %558 = vmatprep.mubr.bf16.mxu0 0
      %559 = vmatmul.mubr.bf16.gmra.mxu0 %v493
      %v560 = vpop.f32.mrf.mxu0
      %v561 = vadd.f32 %v471, %v560
      %v562 = vpop.f32.mrf.mxu0
      %v563 = vpop.f32.mrf.mxu0
      %v564 = vadd.f32 %v471, %v563
      %v565 = vpop.f32.mrf.mxu0
      %566 = vmatprep.mubr.bf16.mxu0 0
      %567 = vmatmul.mubr.bf16.gmra.mxu0 %v496
      %v568 = vpop.f32.mrf.mxu0
      %v569 = vadd.f32 %v471, %v568
      %v570 = vpop.f32.mrf.mxu0
      %v571 = vpop.f32.mrf.mxu0
      %v572 = vadd.f32 %v471, %v571
      %v573 = vpop.f32.mrf.mxu0
      %574 = vmatprep.mubr.bf16.mxu0 0
      %575 = vmatmul.mubr.bf16.gmra.mxu0 %v499
      %v576 = vpop.f32.mrf.mxu0
      %v577 = vadd.f32 %v471, %v576
      %v578 = vpop.f32.mrf.mxu0
      %v579 = vpop.f32.mrf.mxu0
      %v580 = vadd.f32 %v471, %v579
      %v581 = vpop.f32.mrf.mxu0
      %582 = vmatprep.mubr.bf16.mxu0 0
      %583 = vmatmul.mubr.bf16.gmra.mxu0 %v502
      %v584 = vpop.f32.mrf.mxu0
      %v585 = vadd.f32 %v471, %v584
      %v586 = vpop.f32.mrf.mxu0
      %v587 = vpop.f32.mrf.mxu0
      %v588 = vadd.f32 %v471, %v587
      %v589 = vpop.f32.mrf.mxu0
      %590 = vmatprep.mubr.bf16.mxu0 0
      %591 = vmatmul.mubr.bf16.gmra.mxu0 %v505
      %v592 = vpop.f32.mrf.mxu0
      %v593 = vadd.f32 %v471, %v592
      %v594 = vpop.f32.mrf.mxu0
      %v595 = vpop.f32.mrf.mxu0
      %v596 = vadd.f32 %v471, %v595
      %v597 = vpop.f32.mrf.mxu0
      %598 = vmatprep.mubr.bf16.mxu0 0
      %599 = vmatmul.mubr.bf16.gmra.mxu0 %v508
      %v600 = vpop.f32.mrf.mxu0
      %v601 = vadd.f32 %v471, %v600
      %v602 = vpop.f32.mrf.mxu0
      %v603 = vpop.f32.mrf.mxu0
      %v604 = vadd.f32 %v471, %v603
      %v605 = vpop.f32.mrf.mxu0
      %606 = vdwg.mxu0
      %vm607 = vcmask 64512
      %608 = vst.msk [vmem:[%s226] sm:$0xff] %vm607, %v545
      %609 = vst.msk [vmem:[%s226 + $0x8] sm:$0xff] %vm607, %v548
      %610 = vst.msk [vmem:[%s226 + $0x10] sm:$0xff] %vm607, %v553
      %611 = vst.msk [vmem:[%s226 + $0x18] sm:$0xff] %vm607, %v556
      %612 = vst.msk [vmem:[%s226 + $0x20] sm:$0xff] %vm607, %v561
      %613 = vst.msk [vmem:[%s226 + $0x28] sm:$0xff] %vm607, %v564
      %614 = vst.msk [vmem:[%s226 + $0x30] sm:$0xff] %vm607, %v569
      %615 = vst.msk [vmem:[%s226 + $0x38] sm:$0xff] %vm607, %v572
      %616 = vst.msk [vmem:[%s226 + $0x40] sm:$0xff] %vm607, %v577
      %617 = vst.msk [vmem:[%s226 + $0x48] sm:$0xff] %vm607, %v580
      %618 = vst.msk [vmem:[%s226 + $0x50] sm:$0xff] %vm607, %v585
      %619 = vst.msk [vmem:[%s226 + $0x58] sm:$0xff] %vm607, %v588
      %620 = vst.msk [vmem:[%s226 + $0x60] sm:$0xff] %vm607, %v593
      %621 = vst.msk [vmem:[%s226 + $0x68] sm:$0xff] %vm607, %v596
      %622 = vst.msk [vmem:[%s226 + $0x70] sm:$0xff] %vm607, %v601
      %623 = vst.msk [vmem:[%s226 + $0x78] sm:$0xff] %vm607, %v604
      %s624 = smul.u32 16, %s16
      %p625 = scmp.lt.s32.totalorder %s624, 63
      %s626 = scalar_select %p625, %s624, 63
      %s627 = smul.addr %s626, 8
      %s628 = scalar_lea.vmem %s5, %s627
      // Predicated region
      $region41: #{quantized_model_forward.1} parent=39 // pred_check
        %p629 = pneg %p144
      $region42: #{quantized_model_forward.1} parent=39 // pred_check_branch
        %631 = sbr.rel (%p629) target = $region44
      $region43: #{quantized_model_forward.1} parent=39 // pred_region
        %s632 = smul.u32 16, %s16
      $region44: #{quantized_model_forward.1} parent=39 // pred_fallthru
        _
    $region40: #{quantized_model_forward.1} parent=5 // pred_fallthru
      _
    %p633 = scmp.le.s32.totalorder 2, %s11
    // Predicated region
    $region45: #{quantized_model_forward.1} parent=5 // pred_check
      %p634 = pneg %p633
    $region46: #{quantized_model_forward.1} parent=5 // pred_check_branch
      %636 = sbr.rel (%p634) target = $region48
    $region47: #{quantized_model_forward.1} parent=5 // pred_region
      %s637 = ssub.s32 %s11, 2
      // Predicated region
      $region49: #{quantized_model_forward.1} parent=47 // pred_check
        %p638 = pneg %p150
      $region50: #{quantized_model_forward.1} parent=47 // pred_check_branch
        %640 = sbr.rel (%p638) target = $region52
      $region51: #{quantized_model_forward.1} parent=47 // pred_region
        %s641 = smul.u32 16, %s17
        %p642 = scmp.lt.s32.totalorder %s641, 63
        %s643 = scalar_select %p642, %s641, 63
        %s644 = smul.addr %s643, 8
        %s645 = scalar_lea.vmem %s5, %s644
      $region52: #{quantized_model_forward.1} parent=47 // pred_fallthru
        _
    $region48: #{quantized_model_forward.1} parent=5 // pred_fallthru
      _
  $region6: #{quantized_model_forward.1} parent=0 // loop_footer
    %s15 = sadd.s32 1, %s11
  $region7: #{quantized_model_forward.1} parent=0 // loop_footer_branch
    %10 = sbr.rel target = $region3
  $region8: #{quantized_model_forward.1} parent=0 // loop_exit
    _

</llo_original>
